<compile_context>
chip_gen: v5e
topology: v5e:2x2
jax: 0.10.0
libtpu: 0.0.40
codegen_flags: <defaults>
</compile_context>

<pallas_src>
import jax
import jax.numpy as jnp
from jax.experimental import pallas as pl
from jax.experimental.pallas import tpu as pltpu


def _residual_block_kernel(x_ref, w_ref, b_ref, o_ref):
    # x_ref/o_ref : (C, TL)   w_ref : (C, C)  [already W + I]   b_ref : (C, 1)
    y = jnp.dot(w_ref[...], x_ref[...], preferred_element_type=jnp.float32)
    o_ref[...] = (y + b_ref[...]).astype(o_ref.dtype)


def _pick_tile_l(C, L, dtype):
    """Largest lane-dense L-tile that divides L and fits a conservative VMEM budget."""
    if L % 128 != 0 or L <= 128:
        # Full-dim exception: single block along L (small / ragged lengths).
        return L
    itemsize = jnp.dtype(dtype).itemsize
    # Budget for double-buffered x-tile + out-tile (2 bufs * 2 arrays).
    budget_bytes = 24 * 1024 * 1024
    for cand in (4096, 2048, 1024, 512, 256):
        if L % cand == 0 and 4 * C * cand * itemsize <= budget_bytes:
            return cand
    return 128


def residual_block(x, w, b, *, tile_l=None):
    """x: (N, C, L), w: (C, C), b: (C,).  Returns x + (W @ x + b) per batch."""
    N, C, L = x.shape
    if tile_l is None:
        tile_l = _pick_tile_l(C, L, x.dtype)
    assert L % tile_l == 0, "tile_l must divide L"
    n_l_tiles = L // tile_l

    # Fold the residual into the conv weights: (W + I) @ x + b == x + W @ x + b.
    w_eff = (w + jnp.eye(C, dtype=w.dtype)).astype(w.dtype)
    b2 = b.reshape(C, 1)

    return pl.pallas_call(
        _residual_block_kernel,
        out_shape=jax.ShapeDtypeStruct((N, C, L), x.dtype),
        grid_spec=pltpu.PrefetchScalarGridSpec(
            num_scalar_prefetch=0,
            grid=(N, n_l_tiles),
            in_specs=[
                pl.BlockSpec((pl.Squeezed(), C, tile_l), lambda n, l: (n, 0, l)),
                pl.BlockSpec((C, C), lambda n, l: (0, 0)),
                pl.BlockSpec((C, 1), lambda n, l: (0, 0)),
            ],
            out_specs=pl.BlockSpec((pl.Squeezed(), C, tile_l),
                                   lambda n, l: (n, 0, l)),
        ),
        compiler_params=pltpu.CompilerParams(
            dimension_semantics=("parallel", "parallel"),
            vmem_limit_bytes=48 * 1024 * 1024,
        ),
    )(x, w_eff, b2)


def _reference(x, w, b):
    return x + (jnp.einsum("oc,ncl->nol", w, x) + b[None, :, None])


if __name__ == "__main__":
    key = jax.random.PRNGKey(0)
    k_x, k_w, k_b, k_x2 = jax.random.split(key, 4)

    # Small shapes consistent with Conv1d NCL input.
    N, C, L = 2, 4, 16
    x = jax.random.normal(k_x, (N, C, L), dtype=jnp.float32)

    # Deterministic Conv1d(C, C, kernel_size=1) params (PyTorch-style uniform
    # bound 1/sqrt(fan_in), fan_in = C * kernel_size = C).
    bound = 1.0 / (C ** 0.5)
    w = jax.random.uniform(k_w, (C, C), dtype=jnp.float32, minval=-bound, maxval=bound)
    b = jax.random.uniform(k_b, (C,), dtype=jnp.float32, minval=-bound, maxval=bound)

    out = jax.block_until_ready(residual_block(x, w, b))
    ref = _reference(x, w, b)
    assert jnp.allclose(out, ref, atol=1e-5, rtol=1e-5), "mismatch vs reference"

    # Exercise the lane-dense L-tiled path as well (L multiple of 128).
    N2, C2, L2 = 2, 8, 512
    x2 = jax.random.normal(k_x2, (N2, C2, L2), dtype=jnp.float32)
    bound2 = 1.0 / (C2 ** 0.5)
    w2 = jax.random.uniform(k_w, (C2, C2), dtype=jnp.float32, minval=-bound2, maxval=bound2)
    b2 = jax.random.uniform(k_b, (C2,), dtype=jnp.float32, minval=-bound2, maxval=bound2)
    out2 = jax.block_until_ready(residual_block(x2, w2, b2))
    ref2 = _reference(x2, w2, b2)
    assert jnp.allclose(out2, ref2, atol=1e-5, rtol=1e-5), "mismatch vs reference (tiled)"

    print("KERNEL_OK")
</pallas_src>

<mosaic_0001>
module attributes {stable_mosaic.version = 11 : i64} {
  func.func @_residual_block_kernel(%arg0: i32, %arg1: i32, %arg2: memref<1x4x16xf32, #tpu.memory_space<vmem>>, %arg3: memref<4x4xf32, #tpu.memory_space<vmem>>, %arg4: memref<4x1xf32, #tpu.memory_space<vmem>>, %arg5: memref<1x4x16xf32, #tpu.memory_space<vmem>>) attributes {dimension_semantics = [#tpu.dimension_semantics<parallel>, #tpu.dimension_semantics<parallel>], iteration_bounds = array<i64: 2, 1>, scalar_prefetch = 0 : i64, scratch_operands = 0 : i64, tpu.core_type = #tpu.core_type<tc>, window_params = [{transform_indices = @transform_0, window_bounds = array<i64: 1, 4, 16>}, {pipeline_mode = #tpu.pipeline_mode<synchronous>, transform_indices = @transform_1, window_bounds = array<i64: 4, 4>}, {pipeline_mode = #tpu.pipeline_mode<synchronous>, transform_indices = @transform_2, window_bounds = array<i64: 4, 1>}, {transform_indices = @transform_3, window_bounds = array<i64: 1, 4, 16>}]} {
    %c0 = arith.constant 0 : index
    %c0_0 = arith.constant 0 : index
    %0 = vector.load %arg3[%c0, %c0_0] : memref<4x4xf32, #tpu.memory_space<vmem>>, vector<4x4xf32>
    %c0_1 = arith.constant 0 : index
    %c0_2 = arith.constant 0 : index
    %c0_3 = arith.constant 0 : index
    %1 = vector.load %arg2[%c0_1, %c0_2, %c0_3] : memref<1x4x16xf32, #tpu.memory_space<vmem>>, vector<1x4x16xf32>
    %2 = vector.shape_cast %1 : vector<1x4x16xf32> to vector<4x16xf32>
    %cst = arith.constant dense<0.000000e+00> : vector<4x16xf32>
    %3 = tpu.matmul %0, %2, %cst {dimension_numbers = #tpu.dot_dimension_numbers<[1], [0], [0], [1], [0, 0, 1, 1], [], []>} : vector<4x4xf32>, vector<4x16xf32>, vector<4x16xf32> -> vector<4x16xf32>
    %c0_4 = arith.constant 0 : index
    %c0_5 = arith.constant 0 : index
    %4 = vector.load %arg4[%c0_4, %c0_5] : memref<4x1xf32, #tpu.memory_space<vmem>>, vector<4x1xf32>
    %5 = vector.broadcast %4 : vector<4x1xf32> to vector<4x16xf32>
    %6 = arith.addf %3, %5 : vector<4x16xf32>
    %c0_6 = arith.constant 0 : index
    %c0_7 = arith.constant 0 : index
    %c0_8 = arith.constant 0 : index
    %7 = vector.load %arg5[%c0_6, %c0_7, %c0_8] : memref<1x4x16xf32, #tpu.memory_space<vmem>>, vector<1x4x16xf32>
    %8 = vector.shape_cast %7 : vector<1x4x16xf32> to vector<4x16xf32>
    %9 = vector.shape_cast %6 : vector<4x16xf32> to vector<1x4x16xf32>
    tpu.vector_store %arg5[%c0_6, %c0_7, %c0_8], %9 {strides = array<i32>} : memref<1x4x16xf32, #tpu.memory_space<vmem>>, vector<1x4x16xf32>,
    return
  }
  func.func @transform_0(%arg0: i32, %arg1: i32) -> (i32, i32, i32) {
    %c0_i32 = arith.constant 0 : i32
    %c0_i32_0 = arith.constant 0 : i32
    return %arg0, %c0_i32, %arg1 : i32, i32, i32
  }
  func.func @transform_1(%arg0: i32, %arg1: i32) -> (i32, i32) {
    %c0_i32 = arith.constant 0 : i32
    %c0_i32_0 = arith.constant 0 : i32
    %c0_i32_1 = arith.constant 0 : i32
    return %c0_i32, %c0_i32_0 : i32, i32
  }
  func.func @transform_2(%arg0: i32, %arg1: i32) -> (i32, i32) {
    %c0_i32 = arith.constant 0 : i32
    %c0_i32_0 = arith.constant 0 : i32
    %c0_i32_1 = arith.constant 0 : i32
    return %c0_i32, %c0_i32_0 : i32, i32
  }
  func.func @transform_3(%arg0: i32, %arg1: i32) -> (i32, i32, i32) {
    %c0_i32 = arith.constant 0 : i32
    %c0_i32_0 = arith.constant 0 : i32
    return %arg0, %c0_i32, %arg1 : i32, i32, i32
  }
}

</mosaic_0001>

<llo_original>
// kernel: tpu_custom_call.1
$region0: #{tpu_custom_call.1}
  #allocation0 [shape = 'u32[]', space=smem, size = 0x4, offset = 0x4, fixed_abs, tag = 'smem constant byte address 0x4 - core index']
  #allocation1 [shape = 'u32[72,128]{1,0:T(1,128)}', space=vmem, size = 0x9000, scoped, tag = 'internal scratch']
  %s0 = inlined_call_operand.hbm [shape: f32[2,4,16], index: 0, kind: input, shape index: {}]
  %s1 = inlined_call_operand.vmem [shape: f32[4,4], index: 1, kind: input, shape index: {}]
  %s2 = inlined_call_operand.vmem [shape: f32[4,1], index: 2, kind: input, shape index: {}]
  %s3 = inlined_call_operand.hbm [shape: f32[2,4,16], index: 3, kind: output, shape index: {}]
  %s4 = sld [smem:[#allocation0]]
  $region49: #{tpu_custom_call.1} parent=0
    _
  %s6 = ssub.s32 1, %s4
  %s7 = scalar_select 0, %s6, %s4
  $region1: #{tpu_custom_call.1} parent=0
    #allocation2 [shape = 'u8[4096]{0}', space=vmem, size = 0x1000, scoped, tag = 'input window, operand 0']
    #allocation3 [shape = 's32[2]{0}', space=sflag, size = 0x8, scoped, tag = 'scoped memory for tpu_custom_call.1']
    #allocation4 [shape = 's32[2]{0}', space=sflag, size = 0x8, scoped, tag = 'scoped memory for tpu_custom_call.1']
    #allocation5 [shape = 'u8[4096]{0}', space=vmem, size = 0x1000, scoped, tag = 'output window, operand 0']
    %8 = vsyncpa [#allocation3], 0
    %s9 = scalar_lea.sflag [#allocation3], 1
    %10 = vsyncpa %s9, 0
    %11 = vsyncpa [#allocation4], 0
    %s12 = scalar_lea.sflag [#allocation4], 1
    %13 = vsyncpa %s12, 0
    loop: start=0, step=1, limit=4
    $region2: #{tpu_custom_call.1} parent=1 // loop_pre_header
      _
    $region3: #{tpu_custom_call.1} parent=1 // loop_header
      %s15 = sphi 0, %s19
      %p16 = scmp.ge.s32.totalorder %s15, 4
      %s22 = sphi 0, %s34
      %s23 = sphi 0, %s30
      %s24 = sphi 0, %s22
      %s25 = sphi 0, %s23
      %s26 = sphi 0, %s24
      %s27 = sphi 0, %s25
      %s39 = sphi 0, %s41
      %s42 = sphi 0, %s39
      %s43 = sphi 0, %s42
      %s59 = sphi 0, %s43
      %s63 = sphi 0, %s63
      %s65 = sphi 0, %s63
      %s66 = sphi 0, %s65
      %s80 = sphi 0, %s66
      %s84 = sphi 0, %s84
      %s86 = sphi 0, %s84
      %s87 = sphi 0, %s86
      %s101 = sphi 0, %s87
      %s109 = sphi 0, %s111
      %s112 = sphi 0, %s109
      %s113 = sphi 0, %s112
      %s129 = sphi 0, %s113
    $region4: #{tpu_custom_call.1} parent=1 // loop_header_branch
      %18 = sbr.rel (%p16) target = $region8
    $region5: #{tpu_custom_call.1} parent=1 // loop_body
      %s20 = ssub.s32 %s15, 1
      %s21 = ssub.s32 %s15, 2
      %s28 = sadd.s32 1, %s23
      %p29 = scmp.ge.s32.totalorder %s28, 1
      %s30 = scalar_select %p29, 0, %s28
      %s31 = sadd.s32 1, %s22
      %s32 = scalar_select %p29, %s31, %s22
      %p33 = scmp.ge.s32.totalorder %s32, 2
      %s34 = scalar_select %p33, 0, %s32
      %s35 = ssub.s32 %s22, %s34
      %s36 = ssub.s32 %s23, %s30
      %s37 = sor.u32 %s35, %s36
      %p38 = scmp.eq.s32.totalorder %s37, 0
      %s40 = sadd.s32 %s39, 1
      %s41 = scalar_select %p38, %s39, %s40
      %p44 = pneg %p38
      %p45 = scmp.eq.s32.totalorder %s15, 1
      %p46 = por %p44, %p45
      %p47 = scmp.ne.s32.totalorder %s39, %s42
      %p48 = scmp.eq.s32.totalorder %s15, 0
      %p49 = por %p47, %p48
      %p50 = scmp.ne.s32.totalorder %s39, %s42
      %p51 = scmp.eq.s32.totalorder %s20, 1
      %p52 = por %p50, %p51
      %p53 = scmp.ne.s32.totalorder %s42, %s43
      %p54 = scmp.eq.s32.totalorder %s20, 0
      %p55 = por %p53, %p54
      %p56 = scmp.ne.s32.totalorder %s42, %s43
      %p57 = scmp.eq.s32.totalorder %s21, 1
      %p58 = por %p56, %p57
      %p60 = scmp.ne.s32.totalorder %s43, %s59
      %p61 = scmp.eq.s32.totalorder %s21, 0
      %p62 = por %p60, %p61
      %s64 = sadd.s32 %s63, 1
      %p67 = scmp.eq.s32.totalorder %s15, 1
      %p68 = scmp.ne.s32.totalorder %s63, %s65
      %p69 = scmp.eq.s32.totalorder %s15, 0
      %p70 = por %p68, %p69
      %p71 = scmp.ne.s32.totalorder %s63, %s65
      %p72 = scmp.eq.s32.totalorder %s20, 1
      %p73 = por %p71, %p72
      %p74 = scmp.ne.s32.totalorder %s65, %s66
      %p75 = scmp.eq.s32.totalorder %s20, 0
      %p76 = por %p74, %p75
      %p77 = scmp.ne.s32.totalorder %s65, %s66
      %p78 = scmp.eq.s32.totalorder %s21, 1
      %p79 = por %p77, %p78
      %p81 = scmp.ne.s32.totalorder %s66, %s80
      %p82 = scmp.eq.s32.totalorder %s21, 0
      %p83 = por %p81, %p82
      %s85 = sadd.s32 %s84, 1
      %p88 = scmp.eq.s32.totalorder %s15, 1
      %p89 = scmp.ne.s32.totalorder %s84, %s86
      %p90 = scmp.eq.s32.totalorder %s15, 0
      %p91 = por %p89, %p90
      %p92 = scmp.ne.s32.totalorder %s84, %s86
      %p93 = scmp.eq.s32.totalorder %s20, 1
      %p94 = por %p92, %p93
      %p95 = scmp.ne.s32.totalorder %s86, %s87
      %p96 = scmp.eq.s32.totalorder %s20, 0
      %p97 = por %p95, %p96
      %p98 = scmp.ne.s32.totalorder %s86, %s87
      %p99 = scmp.eq.s32.totalorder %s21, 1
      %p100 = por %p98, %p99
      %p102 = scmp.ne.s32.totalorder %s87, %s101
      %p103 = scmp.eq.s32.totalorder %s21, 0
      %p104 = por %p102, %p103
      %s105 = ssub.s32 %s22, %s34
      %s106 = ssub.s32 %s23, %s30
      %s107 = sor.u32 %s105, %s106
      %p108 = scmp.eq.s32.totalorder %s107, 0
      %s110 = sadd.s32 %s109, 1
      %s111 = scalar_select %p108, %s109, %s110
      %p114 = pneg %p108
      %p115 = scmp.eq.s32.totalorder %s15, 1
      %p116 = por %p114, %p115
      %p117 = scmp.ne.s32.totalorder %s109, %s112
      %p118 = scmp.eq.s32.totalorder %s15, 0
      %p119 = por %p117, %p118
      %p120 = scmp.ne.s32.totalorder %s109, %s112
      %p121 = scmp.eq.s32.totalorder %s20, 1
      %p122 = por %p120, %p121
      %p123 = scmp.ne.s32.totalorder %s112, %s113
      %p124 = scmp.eq.s32.totalorder %s20, 0
      %p125 = por %p123, %p124
      %p126 = scmp.ne.s32.totalorder %s112, %s113
      %p127 = scmp.eq.s32.totalorder %s21, 1
      %p128 = por %p126, %p127
      %p130 = scmp.ne.s32.totalorder %s113, %s129
      %p131 = scmp.eq.s32.totalorder %s21, 0
      %p132 = por %p130, %p131
      %p133 = scmp.le.s32.totalorder 1, %s15
      %p134 = scmp.lt.s32.totalorder %s15, 3
      %p135 = pnand %p133, %p134
      %p136 = pneg %p135
      // Predicated region
      $region9: #{tpu_custom_call.1} parent=5 // pred_check
        _
      $region10: #{tpu_custom_call.1} parent=5 // pred_check_branch
        %138 = sbr.rel (%p135) target = $region12
      $region11: #{tpu_custom_call.1} parent=5 // pred_region
        %s139 = ssub.s32 %s15, 1
        // Predicated region
        $region13: #{tpu_custom_call.1} parent=11 // pred_check
          %p140 = pneg %p76
        $region14: #{tpu_custom_call.1} parent=11 // pred_check_branch
          %142 = sbr.rel (%p140) target = $region16
        $region15: #{tpu_custom_call.1} parent=11 // pred_region
          _
        $region16: #{tpu_custom_call.1} parent=11 // pred_fallthru
          _
        // Predicated region
        $region17: #{tpu_custom_call.1} parent=11 // pred_check
          %p143 = pneg %p97
        $region18: #{tpu_custom_call.1} parent=11 // pred_check_branch
          %145 = sbr.rel (%p143) target = $region20
        $region19: #{tpu_custom_call.1} parent=11 // pred_region
          _
        $region20: #{tpu_custom_call.1} parent=11 // pred_fallthru
          _
      $region12: #{tpu_custom_call.1} parent=5 // pred_fallthru
        _
      %p146 = scmp.lt.s32.totalorder %s15, 2
      // Predicated region
      $region21: #{tpu_custom_call.1} parent=5 // pred_check
        %p147 = pneg %p146
      $region22: #{tpu_custom_call.1} parent=5 // pred_check_branch
        %149 = sbr.rel (%p147) target = $region24
      $region23: #{tpu_custom_call.1} parent=5 // pred_region
        // Predicated region
        $region25: #{tpu_custom_call.1} parent=23 // pred_check
          %p150 = pneg %p49
        $region26: #{tpu_custom_call.1} parent=23 // pred_check_branch
          %152 = sbr.rel (%p150) target = $region28
        $region27: #{tpu_custom_call.1} parent=23 // pred_region
          %s153 = sand.u32 %s39, 1
          %s154 = scalar_lea.sflag [#allocation3], %s153
          %s155 = sand.u32 %s39, 1
          %s156 = smul.addr %s155, 4
          %s157 = scalar_lea.vmem [#allocation2], %s156
          %159 = vsyncadd %s154, 0
          %s160 = sadd.s32 %s23, %s22
          %s161 = smul.addr %s160, 4
          %s162 = scalar_lea.hbm %s0, %s161
          %s164 = sshll.u32 %s162, 4
          %s165 = int_to_ptr.hbm [resolvable:$true] %s164
          %s166 = sshll.u32 %s157, 4
          %s167 = int_to_ptr.vmem [resolvable:$true] %s166
          %169 = dma.hbm_to_vmem [thread:$0]  %s165, 64, %s167, %s154
        $region28: #{tpu_custom_call.1} parent=23 // pred_fallthru
          _
      $region24: #{tpu_custom_call.1} parent=5 // pred_fallthru
        _
      %p170 = scmp.le.s32.totalorder 1, %s15
      %p171 = scmp.lt.s32.totalorder %s15, 3
      %p172 = pnand %p170, %p171
      %p173 = pneg %p172
      // Predicated region
      $region29: #{tpu_custom_call.1} parent=5 // pred_check
        _
      $region30: #{tpu_custom_call.1} parent=5 // pred_check_branch
        %175 = sbr.rel (%p172) target = $region32
      $region31: #{tpu_custom_call.1} parent=5 // pred_region
        %s176 = ssub.s32 %s15, 1
        %s177 = sand.u32 %s42, 1
        %s178 = scalar_lea.sflag [#allocation3], %s177
        %s179 = sand.u32 %s42, 1
        %s180 = smul.addr %s179, 4
        %s181 = scalar_lea.vmem [#allocation2], %s180
        // Predicated region
        $region33: #{tpu_custom_call.1} parent=31 // pred_check
          %p182 = pneg %p55
        $region34: #{tpu_custom_call.1} parent=31 // pred_check_branch
          %184 = sbr.rel (%p182) target = $region36
        $region35: #{tpu_custom_call.1} parent=31 // pred_region
          %186 = dma.done %s178, 64
        $region36: #{tpu_custom_call.1} parent=31 // pred_fallthru
          _
        %s187 = sand.u32 %s42, 1
        %s188 = scalar_lea.sflag [#allocation3], %s187
        %s189 = sand.u32 %s42, 1
        %s190 = smul.addr %s189, 4
        %s191 = scalar_lea.vmem [#allocation2], %s190
        %p192 = pneg %p55
        %p193 = pneg %p52
        %p194 = pneg %p76
        %p195 = pneg %p73
        %p196 = pneg %p97
        %p197 = pneg %p94
        %p198 = pneg %p125
        %p199 = pneg %p122
        %s200 = sand.u32 %s112, 1
        %s201 = scalar_lea.sflag [#allocation4], %s200
        %s202 = sand.u32 %s112, 1
        %s203 = smul.addr %s202, 4
        %s204 = scalar_lea.vmem [#allocation5], %s203
        %v205 = vld [vmem:[%s1] sm:$0xf]
        %v206 = vld [vmem:[%s181] sm:$0xf]
        %v207 = vld [vmem:[%s2] sm:$0xf]
        %209 = vset.pattern.permute.xlu0 0
        %210 = vperm.xlu0 %209, %v207
        %v211 = vpop.permute.xlu0 %210
        %vm213 = vcmask 31744
        %v215 = vsel %vm213, %v205, 0
        %vm217 = vcmask 1043456
        %v219 = vsel %vm217, %v206, 0
        %221 = vmatpush.msra.mxu0 0.0
        %222 = vmatpush.msra.mxu0 0.0
        %223 = vmatpush.msra.mxu0 0.0
        %224 = vmatpush.msra.mxu0 0.0
        %225 = vmatpush.msra.mxu0 0.0
        %226 = vmatpush.msra.mxu0 0.0
        %227 = vmatpush.msra.mxu0 0.0
        %228 = vmatpush.msra.mxu0 0.0
        %229 = vmatpush.msra.mxu0 0.0
        %230 = vmatpush.msra.mxu0 0.0
        %231 = vmatpush.msra.mxu0 0.0
        %232 = vmatpush.msra.mxu0 0.0
        %233 = vmatpush.msra.mxu0 0.0
        %234 = vmatpush.msra.mxu0 0.0
        %235 = vmatpush.msra.mxu0 0.0
        %236 = vmatpush.msra.mxu0 %v219
        %237 = vmatmul.f32.gmra.mxu0 %v215
        %v238 = vpop.f32.mrf.mxu0
        %v239 = vadd.f32 %v211, %v238
        %240 = vdwg.mxu0
        %vm241 = vcmask 125952
        %242 = vst.msk [vmem:[%s204] sm:$0xf] %vm241, %v239
        %s243 = sand.u32 %s112, 1
        %s244 = scalar_lea.sflag [#allocation4], %s243
        %s245 = sand.u32 %s112, 1
        %s246 = smul.addr %s245, 4
        %s247 = scalar_lea.vmem [#allocation5], %s246
        // Predicated region
        $region37: #{tpu_custom_call.1} parent=31 // pred_check
          %p248 = pneg %p122
        $region38: #{tpu_custom_call.1} parent=31 // pred_check_branch
          %250 = sbr.rel (%p248) target = $region40
        $region39: #{tpu_custom_call.1} parent=31 // pred_region
          %252 = vsyncadd %s244, 0
          %s253 = sadd.s32 %s25, %s24
          %s254 = smul.addr %s253, 4
          %s255 = scalar_lea.hbm %s3, %s254
          %s257 = sshll.u32 %s247, 4
          %s258 = int_to_ptr.vmem [resolvable:$true] %s257
          %s259 = sshll.u32 %s255, 4
          %s260 = int_to_ptr.hbm [resolvable:$true] %s259
          %262 = dma.vmem_to_hbm [thread:$0]  %s258, 64, %s260, %s244
        $region40: #{tpu_custom_call.1} parent=31 // pred_fallthru
          _
      $region32: #{tpu_custom_call.1} parent=5 // pred_fallthru
        _
      %p263 = scmp.le.s32.totalorder 2, %s15
      // Predicated region
      $region41: #{tpu_custom_call.1} parent=5 // pred_check
        %p264 = pneg %p263
      $region42: #{tpu_custom_call.1} parent=5 // pred_check_branch
        %266 = sbr.rel (%p264) target = $region44
      $region43: #{tpu_custom_call.1} parent=5 // pred_region
        %s267 = ssub.s32 %s15, 2
        // Predicated region
        $region45: #{tpu_custom_call.1} parent=43 // pred_check
          %p268 = pneg %p128
        $region46: #{tpu_custom_call.1} parent=43 // pred_check_branch
          %270 = sbr.rel (%p268) target = $region48
        $region47: #{tpu_custom_call.1} parent=43 // pred_region
          %s271 = sand.u32 %s113, 1
          %s272 = scalar_lea.sflag [#allocation4], %s271
          %s273 = sand.u32 %s113, 1
          %s274 = smul.addr %s273, 4
          %s275 = scalar_lea.vmem [#allocation5], %s274
          %277 = dma.done %s272, 64
        $region48: #{tpu_custom_call.1} parent=43 // pred_fallthru
          _
      $region44: #{tpu_custom_call.1} parent=5 // pred_fallthru
        _
    $region6: #{tpu_custom_call.1} parent=1 // loop_footer
      %s19 = sadd.s32 1, %s15
    $region7: #{tpu_custom_call.1} parent=1 // loop_footer_branch
      %14 = sbr.rel target = $region3
    $region8: #{tpu_custom_call.1} parent=1 // loop_exit
      _
    %278 = vsyncpa [#allocation3], 1
    %s279 = scalar_lea.sflag [#allocation3], 1
    %280 = vsyncpa %s279, 1
    %281 = vsyncpa [#allocation4], 1
    %s282 = scalar_lea.sflag [#allocation4], 1
    %283 = vsyncpa %s282, 1

</llo_original>
